<compile_context>
chip_gen: v7x
topology: tpu7x:2x2x1
jax: 0.10.0
libtpu: 0.0.40
codegen_flags: <defaults>
</compile_context>

<pallas_src>
import functools

import jax
import jax.numpy as jnp
from jax.experimental import pallas as pl
from jax.experimental.pallas import tpu as pltpu


def _round_up(x, m):
    return ((x + m - 1) // m) * m


def _cdiv(a, b):
    return (a + b - 1) // b


def _linear_kernel(x_ref, w_ref, b_ref, o_ref):
    # x_ref: [tile_n, dim]   one batch tile per grid step (double-buffered)
    # w_ref: [dim, c_pad]    pre-transposed, VMEM-resident across all steps
    # b_ref: [1, c_pad]      f32, VMEM-resident
    x = x_ref[...].astype(w_ref.dtype)  # no-op on the default f32 path
    acc = jnp.dot(x, w_ref[...], preferred_element_type=jnp.float32)
    o_ref[...] = (acc + b_ref[...]).astype(o_ref.dtype)


@functools.partial(jax.jit, static_argnames=("tile_n", "use_bf16"))
def classifier_forward(x, fc_weight, fc_bias, *, tile_n=1024, use_bf16=False):
    """Pallas equivalent of F.linear(x, weight=fc_weight, bias=fc_bias).

    x:         [N, dim]          float32
    fc_weight: [class_num, dim]  float32 (PyTorch nn.Linear layout)
    fc_bias:   [class_num]       float32
    returns:   [N, class_num]    float32
    use_bf16:  explicit opt-in; casts the resident weight to bf16 in the
               wrapper and x per-tile in VMEM (relaxes f32 accuracy).
    """
    n, dim = x.shape
    class_num = fc_weight.shape[0]
    out_dtype = x.dtype

    # Lane-dense output: pad classes up to a multiple of 128 (sliced off later).
    c_pad = _round_up(class_num, 128)

    # One-time weight/bias prep (tiny vs. the streamed x traffic).
    w_t = fc_weight.T  # [dim, class_num] -> MXU-native orientation
    if c_pad != class_num:
        w_t = jnp.pad(w_t, ((0, 0), (0, c_pad - class_num)))
        b_p = jnp.pad(fc_bias, (0, c_pad - class_num))
    else:
        b_p = fc_bias
    b_p = b_p.astype(jnp.float32).reshape(1, c_pad)
    if use_bf16:
        w_t = w_t.astype(jnp.bfloat16)

    x_item = jnp.dtype(x.dtype).itemsize
    w_item = jnp.dtype(w_t.dtype).itemsize
    o_item = jnp.dtype(out_dtype).itemsize

    # VMEM budget: stay under v5e's 16 MiB default scoped VMEM (also fine for
    # v6e's 32 MiB scoped default and v7x's 64 MiB physical VMEM).
    budget = 12 * 1024 * 1024
    resident = c_pad * dim * w_item + c_pad * 4          # weight + bias
    per_row = 2 * dim * x_item + 2 * c_pad * o_item      # double-buffered x + out
    tile_cap = max((budget - resident) // per_row, 8)
    # TODO(synk): add a class-dim grid axis (tile the [dim, c_pad] weight) once
    # a huge classifier head no longer fits the resident-weight VMEM budget.

    # Balanced row tiling with NO batch padding; partial last block is masked.
    align = 16 if use_bf16 else 8  # bf16 packs 2 rows/sublane
    target = max(min(tile_n, tile_cap), align)
    num_tiles = max(_cdiv(n, target), 1)
    if num_tiles == 1 and n >= 1024:
        num_tiles = 2  # keep both v7x TensorCores busy for large batches
    tile = _round_up(_cdiv(n, num_tiles), align)
    grid = (_cdiv(n, tile),)

    cost = pl.CostEstimate(
        flops=2 * n * dim * c_pad,
        transcendentals=0,
        bytes_accessed=(n * dim * x_item
                        + c_pad * dim * w_item
                        + c_pad * 4
                        + n * c_pad * o_item),
    )

    out = pl.pallas_call(
        _linear_kernel,
        out_shape=jax.ShapeDtypeStruct((n, c_pad), out_dtype),
        grid_spec=pltpu.PrefetchScalarGridSpec(
            num_scalar_prefetch=0,
            grid=grid,
            in_specs=[
                # x: one row tile per grid step (double-buffered by Pallas).
                pl.BlockSpec((tile, dim), lambda i: (i, 0)),
                # weight / bias: constant block index -> fetched once, resident.
                pl.BlockSpec((dim, c_pad), lambda i: (0, 0)),
                pl.BlockSpec((1, c_pad), lambda i: (0, 0)),
            ],
            out_specs=pl.BlockSpec((tile, c_pad), lambda i: (i, 0)),
        ),
        compiler_params=pltpu.CompilerParams(
            dimension_semantics=("parallel",),
        ),
        cost_estimate=cost,
    )(x, w_t, b_p)

    return out[:, :class_num]


if __name__ == "__main__":
    # Module config: default dataset (non-CUB) -> dim = 640; few-shot head class_num = 5.
    dim = 640
    class_num = 5
    batch = 8

    key = jax.random.PRNGKey(0)
    kx, kw, kb = jax.random.split(key, 3)

    x = jax.random.normal(kx, (batch, dim), dtype=jnp.float32)
    # Deterministic synthetic params matching nn.Linear(dim, class_num) shapes.
    fc_weight = jax.random.normal(kw, (class_num, dim), dtype=jnp.float32) * 0.02
    fc_bias = jax.random.normal(kb, (class_num,), dtype=jnp.float32) * 0.01

    logits = classifier_forward(x, fc_weight, fc_bias)
    jax.block_until_ready(logits)

    # Reference check in plain JAX (same math as F.linear).
    ref = x @ fc_weight.T + fc_bias
    assert logits.shape == (batch, class_num)
    assert jnp.allclose(logits, ref, atol=1e-4, rtol=1e-4)

    print("KERNEL_OK")
</pallas_src>

<mosaic_0001>
module attributes {stable_mosaic.version = 11 : i64} {
  func.func @_linear_kernel(%arg0: i32, %arg1: memref<8x640xf32, #tpu.memory_space<vmem>>, %arg2: memref<640x128xf32, #tpu.memory_space<vmem>>, %arg3: memref<1x128xf32, #tpu.memory_space<vmem>>, %arg4: memref<8x128xf32, #tpu.memory_space<vmem>>) attributes {dimension_semantics = [#tpu.dimension_semantics<parallel>], iteration_bounds = array<i64: 1>, scalar_prefetch = 0 : i64, scratch_operands = 0 : i64, tpu.core_type = #tpu.core_type<tc>, window_params = [{transform_indices = @transform_0, window_bounds = array<i64: 8, 640>}, {pipeline_mode = #tpu.pipeline_mode<synchronous>, transform_indices = @transform_1, window_bounds = array<i64: 640, 128>}, {pipeline_mode = #tpu.pipeline_mode<synchronous>, transform_indices = @transform_2, window_bounds = array<i64: 1, 128>}, {transform_indices = @transform_3, window_bounds = array<i64: 8, 128>}]} {
    %c0 = arith.constant 0 : index
    %c0_0 = arith.constant 0 : index
    %0 = vector.load %arg1[%c0, %c0_0] : memref<8x640xf32, #tpu.memory_space<vmem>>, vector<8x640xf32>
    %c0_1 = arith.constant 0 : index
    %c0_2 = arith.constant 0 : index
    %1 = vector.load %arg2[%c0_1, %c0_2] : memref<640x128xf32, #tpu.memory_space<vmem>>, vector<640x128xf32>
    %cst = arith.constant dense<0.000000e+00> : vector<8x128xf32>
    %2 = tpu.matmul %0, %1, %cst {dimension_numbers = #tpu.dot_dimension_numbers<[1], [0], [0], [1], [0, 0, 1, 1], [], []>} : vector<8x640xf32>, vector<640x128xf32>, vector<8x128xf32> -> vector<8x128xf32>
    %c0_3 = arith.constant 0 : index
    %c0_4 = arith.constant 0 : index
    %3 = vector.load %arg3[%c0_3, %c0_4] : memref<1x128xf32, #tpu.memory_space<vmem>>, vector<1x128xf32>
    %4 = vector.broadcast %3 : vector<1x128xf32> to vector<8x128xf32>
    %5 = arith.addf %2, %4 : vector<8x128xf32>
    %c0_5 = arith.constant 0 : index
    %c0_6 = arith.constant 0 : index
    %6 = vector.load %arg4[%c0_5, %c0_6] : memref<8x128xf32, #tpu.memory_space<vmem>>, vector<8x128xf32>
    tpu.vector_store %arg4[%c0_5, %c0_6], %5 {strides = array<i32>} : memref<8x128xf32, #tpu.memory_space<vmem>>, vector<8x128xf32>,
    return
  }
  func.func @transform_0(%arg0: i32) -> (i32, i32) {
    %c0_i32 = arith.constant 0 : i32
    %c0_i32_0 = arith.constant 0 : i32
    return %arg0, %c0_i32 : i32, i32
  }
  func.func @transform_1(%arg0: i32) -> (i32, i32) {
    %c0_i32 = arith.constant 0 : i32
    %c0_i32_0 = arith.constant 0 : i32
    %c0_i32_1 = arith.constant 0 : i32
    return %c0_i32, %c0_i32_0 : i32, i32
  }
  func.func @transform_2(%arg0: i32) -> (i32, i32) {
    %c0_i32 = arith.constant 0 : i32
    %c0_i32_0 = arith.constant 0 : i32
    %c0_i32_1 = arith.constant 0 : i32
    return %c0_i32, %c0_i32_0 : i32, i32
  }
  func.func @transform_3(%arg0: i32) -> (i32, i32) {
    %c0_i32 = arith.constant 0 : i32
    %c0_i32_0 = arith.constant 0 : i32
    return %arg0, %c0_i32 : i32, i32
  }
}

</mosaic_0001>

<llo_original>
// kernel: classifier_forward.1
$region0: #{classifier_forward.1}
  #allocation0 [shape = 'u32[]', space=smem, size = 0x4, offset = 0x4, fixed_abs, tag = 'smem constant byte address 0x4 - core index']
  #allocation1 [shape = 'u32[144,128]{1,0:T(1,128)}', space=vmem, size = 0x12000, scoped, tag = 'internal scratch']
  %s0 = inlined_call_operand.vmem [shape: f32[8,640], index: 0, kind: input, shape index: {}]
  %s1 = inlined_call_operand.vmem [shape: f32[640,128], index: 1, kind: input, shape index: {}]
  %s2 = inlined_call_operand.vmem [shape: f32[1,128], index: 2, kind: input, shape index: {}]
  %s3 = inlined_call_operand.hbm [shape: f32[8,128], index: 3, kind: output, shape index: {}]
  %s4 = sld [smem:[#allocation0]]
  $region22: #{classifier_forward.1} parent=0
    _
  %s6 = ssub.s32 1, %s4
  %s7 = scalar_select 0, %s6, %s4
  $region1: #{classifier_forward.1} parent=0
    #allocation2 [shape = 'u8[4096]{0}', space=vmem, size = 0x1000, scoped, tag = 'output window, operand 0, single buffered']
    #allocation3 [shape = 's32[1]{0}', space=sflag, size = 0x4, scoped, tag = 'scoped memory for classifier_forward.1']
    %8 = vsyncpa [#allocation3], 0
    // Predicated region
    $region2: #{classifier_forward.1} parent=1 // pred_check
      _
    $region3: #{classifier_forward.1} parent=1 // pred_check_branch
      %10 = sbr.rel (0) target = $region5
    $region4: #{classifier_forward.1} parent=1 // pred_region
      _
    $region5: #{classifier_forward.1} parent=1 // pred_fallthru
      _
    // Predicated region
    $region6: #{classifier_forward.1} parent=1 // pred_check
      _
    $region7: #{classifier_forward.1} parent=1 // pred_check_branch
      %12 = sbr.rel (0) target = $region9
    $region8: #{classifier_forward.1} parent=1 // pred_region
      _
    $region9: #{classifier_forward.1} parent=1 // pred_fallthru
      _
    // Predicated region
    $region10: #{classifier_forward.1} parent=1 // pred_check
      _
    $region11: #{classifier_forward.1} parent=1 // pred_check_branch
      %14 = sbr.rel (0) target = $region13
    $region12: #{classifier_forward.1} parent=1 // pred_region
      _
    $region13: #{classifier_forward.1} parent=1 // pred_fallthru
      _
    %v15 = vld [vmem:[%s0] sm:$0xff]
    %v16 = vld [vmem:[%s0 + $0x8] sm:$0xff]
    %v17 = vld [vmem:[%s0 + $0x10] sm:$0xff]
    %v18 = vld [vmem:[%s0 + $0x18] sm:$0xff]
    %v19 = vld [vmem:[%s0 + $0x20] sm:$0xff]
    %v20 = vld [vmem:[%s1] sm:$0xff]
    %v21 = vld [vmem:[%s1 + $0x8] sm:$0xff]
    %v22 = vld [vmem:[%s1 + $0x10] sm:$0xff]
    %v23 = vld [vmem:[%s1 + $0x18] sm:$0xff]
    %v24 = vld [vmem:[%s1 + $0x20] sm:$0xff]
    %v25 = vld [vmem:[%s1 + $0x28] sm:$0xff]
    %v26 = vld [vmem:[%s1 + $0x30] sm:$0xff]
    %v27 = vld [vmem:[%s1 + $0x38] sm:$0xff]
    %v28 = vld [vmem:[%s1 + $0x40] sm:$0xff]
    %v29 = vld [vmem:[%s1 + $0x48] sm:$0xff]
    %v30 = vld [vmem:[%s1 + $0x50] sm:$0xff]
    %v31 = vld [vmem:[%s1 + $0x58] sm:$0xff]
    %v32 = vld [vmem:[%s1 + $0x60] sm:$0xff]
    %v33 = vld [vmem:[%s1 + $0x68] sm:$0xff]
    %v34 = vld [vmem:[%s1 + $0x70] sm:$0xff]
    %v35 = vld [vmem:[%s1 + $0x78] sm:$0xff]
    %v36 = vld [vmem:[%s1 + $0x80] sm:$0xff]
    %v37 = vld [vmem:[%s1 + $0x88] sm:$0xff]
    %v38 = vld [vmem:[%s1 + $0x90] sm:$0xff]
    %v39 = vld [vmem:[%s1 + $0x98] sm:$0xff]
    %v40 = vld [vmem:[%s1 + $0xa0] sm:$0xff]
    %v41 = vld [vmem:[%s1 + $0xa8] sm:$0xff]
    %v42 = vld [vmem:[%s1 + $0xb0] sm:$0xff]
    %v43 = vld [vmem:[%s1 + $0xb8] sm:$0xff]
    %v44 = vld [vmem:[%s1 + $0xc0] sm:$0xff]
    %v45 = vld [vmem:[%s1 + $0xc8] sm:$0xff]
    %v46 = vld [vmem:[%s1 + $0xd0] sm:$0xff]
    %v47 = vld [vmem:[%s1 + $0xd8] sm:$0xff]
    %v48 = vld [vmem:[%s1 + $0xe0] sm:$0xff]
    %v49 = vld [vmem:[%s1 + $0xe8] sm:$0xff]
    %v50 = vld [vmem:[%s1 + $0xf0] sm:$0xff]
    %v51 = vld [vmem:[%s1 + $0xf8] sm:$0xff]
    %v52 = vld [vmem:[%s1 + $0x100] sm:$0xff]
    %v53 = vld [vmem:[%s1 + $0x108] sm:$0xff]
    %v54 = vld [vmem:[%s1 + $0x110] sm:$0xff]
    %v55 = vld [vmem:[%s1 + $0x118] sm:$0xff]
    %v56 = vld [vmem:[%s1 + $0x120] sm:$0xff]
    %v57 = vld [vmem:[%s1 + $0x128] sm:$0xff]
    %v58 = vld [vmem:[%s1 + $0x130] sm:$0xff]
    %v59 = vld [vmem:[%s1 + $0x138] sm:$0xff]
    %v60 = vld [vmem:[%s1 + $0x140] sm:$0xff]
    %v61 = vld [vmem:[%s1 + $0x148] sm:$0xff]
    %v62 = vld [vmem:[%s1 + $0x150] sm:$0xff]
    %v63 = vld [vmem:[%s1 + $0x158] sm:$0xff]
    %v64 = vld [vmem:[%s1 + $0x160] sm:$0xff]
    %v65 = vld [vmem:[%s1 + $0x168] sm:$0xff]
    %v66 = vld [vmem:[%s1 + $0x170] sm:$0xff]
    %v67 = vld [vmem:[%s1 + $0x178] sm:$0xff]
    %v68 = vld [vmem:[%s1 + $0x180] sm:$0xff]
    %v69 = vld [vmem:[%s1 + $0x188] sm:$0xff]
    %v70 = vld [vmem:[%s1 + $0x190] sm:$0xff]
    %v71 = vld [vmem:[%s1 + $0x198] sm:$0xff]
    %v72 = vld [vmem:[%s1 + $0x1a0] sm:$0xff]
    %v73 = vld [vmem:[%s1 + $0x1a8] sm:$0xff]
    %v74 = vld [vmem:[%s1 + $0x1b0] sm:$0xff]
    %v75 = vld [vmem:[%s1 + $0x1b8] sm:$0xff]
    %v76 = vld [vmem:[%s1 + $0x1c0] sm:$0xff]
    %v77 = vld [vmem:[%s1 + $0x1c8] sm:$0xff]
    %v78 = vld [vmem:[%s1 + $0x1d0] sm:$0xff]
    %v79 = vld [vmem:[%s1 + $0x1d8] sm:$0xff]
    %v80 = vld [vmem:[%s1 + $0x1e0] sm:$0xff]
    %v81 = vld [vmem:[%s1 + $0x1e8] sm:$0xff]
    %v82 = vld [vmem:[%s1 + $0x1f0] sm:$0xff]
    %v83 = vld [vmem:[%s1 + $0x1f8] sm:$0xff]
    %v84 = vld [vmem:[%s1 + $0x200] sm:$0xff]
    %v85 = vld [vmem:[%s1 + $0x208] sm:$0xff]
    %v86 = vld [vmem:[%s1 + $0x210] sm:$0xff]
    %v87 = vld [vmem:[%s1 + $0x218] sm:$0xff]
    %v88 = vld [vmem:[%s1 + $0x220] sm:$0xff]
    %v89 = vld [vmem:[%s1 + $0x228] sm:$0xff]
    %v90 = vld [vmem:[%s1 + $0x230] sm:$0xff]
    %v91 = vld [vmem:[%s1 + $0x238] sm:$0xff]
    %v92 = vld [vmem:[%s1 + $0x240] sm:$0xff]
    %v93 = vld [vmem:[%s1 + $0x248] sm:$0xff]
    %v94 = vld [vmem:[%s1 + $0x250] sm:$0xff]
    %v95 = vld [vmem:[%s1 + $0x258] sm:$0xff]
    %v96 = vld [vmem:[%s1 + $0x260] sm:$0xff]
    %v97 = vld [vmem:[%s1 + $0x268] sm:$0xff]
    %v98 = vld [vmem:[%s1 + $0x270] sm:$0xff]
    %v99 = vld [vmem:[%s1 + $0x278] sm:$0xff]
    %v100 = vld [vmem:[%s2] sm:$0x1]
    %v102 = vlaneseq
    %v103 = vshrl.u32 %v102, 7
    %v104 = vsub.s32 0, %v103
    %v105 = vrot.slane %v100, %v104
    %107 = vmatprep.subr.mxu0 0.0
    %108 = vmatpush1.msra.mxu0 %v20
    %109 = vmatprep.subr.mxu0 0.0
    %110 = vmatpush1.msra.mxu0 %v21
    %111 = vmatprep.subr.mxu0 0.0
    %112 = vmatpush1.msra.mxu0 %v22
    %113 = vmatprep.subr.mxu0 0.0
    %114 = vmatpush1.msra.mxu0 %v23
    %115 = vmatprep.subr.mxu0 0.0
    %116 = vmatpush1.msra.mxu0 %v24
    %117 = vmatprep.subr.mxu0 0.0
    %118 = vmatpush1.msra.mxu0 %v25
    %119 = vmatprep.subr.mxu0 0.0
    %120 = vmatpush1.msra.mxu0 %v26
    %121 = vmatprep.subr.mxu0 0.0
    %122 = vmatpush1.msra.mxu0 %v27
    %123 = vmatprep.subr.mxu0 0.0
    %124 = vmatpush1.msra.mxu0 %v28
    %125 = vmatprep.subr.mxu0 0.0
    %126 = vmatpush1.msra.mxu0 %v29
    %127 = vmatprep.subr.mxu0 0.0
    %128 = vmatpush1.msra.mxu0 %v30
    %129 = vmatprep.subr.mxu0 0.0
    %130 = vmatpush1.msra.mxu0 %v31
    %131 = vmatprep.subr.mxu0 0.0
    %132 = vmatpush1.msra.mxu0 %v32
    %133 = vmatprep.subr.mxu0 0.0
    %134 = vmatpush1.msra.mxu0 %v33
    %135 = vmatprep.subr.mxu0 0.0
    %136 = vmatpush1.msra.mxu0 %v34
    %137 = vmatprep.subr.mxu0 0.0
    %138 = vmatpush1.msra.mxu0 %v35
    %139 = vmatprep.subr.mxu0 0.0
    %140 = vmatpush1.msra.mxu0 %v36
    %141 = vmatprep.subr.mxu0 0.0
    %142 = vmatpush1.msra.mxu0 %v37
    %143 = vmatprep.subr.mxu0 0.0
    %144 = vmatpush1.msra.mxu0 %v38
    %145 = vmatprep.subr.mxu0 0.0
    %146 = vmatpush1.msra.mxu0 %v39
    %147 = vmatprep.subr.mxu0 0.0
    %148 = vmatpush1.msra.mxu0 %v40
    %149 = vmatprep.subr.mxu0 0.0
    %150 = vmatpush1.msra.mxu0 %v41
    %151 = vmatprep.subr.mxu0 0.0
    %152 = vmatpush1.msra.mxu0 %v42
    %153 = vmatprep.subr.mxu0 0.0
    %154 = vmatpush1.msra.mxu0 %v43
    %155 = vmatprep.subr.mxu0 0.0
    %156 = vmatpush1.msra.mxu0 %v44
    %157 = vmatprep.subr.mxu0 0.0
    %158 = vmatpush1.msra.mxu0 %v45
    %159 = vmatprep.subr.mxu0 0.0
    %160 = vmatpush1.msra.mxu0 %v46
    %161 = vmatprep.subr.mxu0 0.0
    %162 = vmatpush1.msra.mxu0 %v47
    %163 = vmatprep.subr.mxu0 0.0
    %164 = vmatpush1.msra.mxu0 %v48
    %165 = vmatprep.subr.mxu0 0.0
    %166 = vmatpush1.msra.mxu0 %v49
    %167 = vmatprep.subr.mxu0 0.0
    %168 = vmatpush1.msra.mxu0 %v50
    %169 = vmatprep.subr.mxu0 0.0
    %170 = vmatpush1.msra.mxu0 %v51
    %171 = vmatprep.mubr.f32.mxu0 %v16
    %172 = vmatmul.mubr.f32.gmra.mrb[0].mxu0 %v15
    %v173 = vpop.f32.mrb[0].mxu0
    %v174 = vadd.f32 %v105, %v173
    %v175 = vpop.f32.mrb[0].mxu0
    %176 = vdwg.mxu0
    %177 = vmatprep.subr.mxu0 0.0
    %178 = vmatpush1.msra.mxu0 %v52
    %179 = vmatprep.subr.mxu0 0.0
    %180 = vmatpush1.msra.mxu0 %v53
    %181 = vmatprep.subr.mxu0 0.0
    %182 = vmatpush1.msra.mxu0 %v54
    %183 = vmatprep.subr.mxu0 0.0
    %184 = vmatpush1.msra.mxu0 %v55
    %185 = vmatprep.subr.mxu0 0.0
    %186 = vmatpush1.msra.mxu0 %v56
    %187 = vmatprep.subr.mxu0 0.0
    %188 = vmatpush1.msra.mxu0 %v57
    %189 = vmatprep.subr.mxu0 0.0
    %190 = vmatpush1.msra.mxu0 %v58
    %191 = vmatprep.subr.mxu0 0.0
    %192 = vmatpush1.msra.mxu0 %v59
    %193 = vmatprep.subr.mxu0 0.0
    %194 = vmatpush1.msra.mxu0 %v60
    %195 = vmatprep.subr.mxu0 0.0
    %196 = vmatpush1.msra.mxu0 %v61
    %197 = vmatprep.subr.mxu0 0.0
    %198 = vmatpush1.msra.mxu0 %v62
    %199 = vmatprep.subr.mxu0 0.0
    %200 = vmatpush1.msra.mxu0 %v63
    %201 = vmatprep.subr.mxu0 0.0
    %202 = vmatpush1.msra.mxu0 %v64
    %203 = vmatprep.subr.mxu0 0.0
    %204 = vmatpush1.msra.mxu0 %v65
    %205 = vmatprep.subr.mxu0 0.0
    %206 = vmatpush1.msra.mxu0 %v66
    %207 = vmatprep.subr.mxu0 0.0
    %208 = vmatpush1.msra.mxu0 %v67
    %209 = vmatprep.subr.mxu0 0.0
    %210 = vmatpush1.msra.mxu0 %v68
    %211 = vmatprep.subr.mxu0 0.0
    %212 = vmatpush1.msra.mxu0 %v69
    %213 = vmatprep.subr.mxu0 0.0
    %214 = vmatpush1.msra.mxu0 %v70
    %215 = vmatprep.subr.mxu0 0.0
    %216 = vmatpush1.msra.mxu0 %v71
    %217 = vmatprep.subr.mxu0 0.0
    %218 = vmatpush1.msra.mxu0 %v72
    %219 = vmatprep.subr.mxu0 0.0
    %220 = vmatpush1.msra.mxu0 %v73
    %221 = vmatprep.subr.mxu0 0.0
    %222 = vmatpush1.msra.mxu0 %v74
    %223 = vmatprep.subr.mxu0 0.0
    %224 = vmatpush1.msra.mxu0 %v75
    %225 = vmatprep.subr.mxu0 0.0
    %226 = vmatpush1.msra.mxu0 %v76
    %227 = vmatprep.subr.mxu0 0.0
    %228 = vmatpush1.msra.mxu0 %v77
    %229 = vmatprep.subr.mxu0 0.0
    %230 = vmatpush1.msra.mxu0 %v78
    %231 = vmatprep.subr.mxu0 0.0
    %232 = vmatpush1.msra.mxu0 %v79
    %233 = vmatprep.subr.mxu0 0.0
    %234 = vmatpush1.msra.mxu0 %v80
    %235 = vmatprep.subr.mxu0 0.0
    %236 = vmatpush1.msra.mxu0 %v81
    %237 = vmatprep.subr.mxu0 0.0
    %238 = vmatpush1.msra.mxu0 %v82
    %239 = vmatprep.subr.mxu0 0.0
    %240 = vmatpush1.msra.mxu0 %v83
    %241 = vmatprep.mubr.f32.mxu0 %v18
    %242 = vmatmul.mubr.f32.gmra.mrb[0].mxu0 %v17
    %v243 = vpop.f32.mrb[0].mxu0
    %v244 = vadd.f32 %v174, %v243
    %v245 = vpop.f32.mrb[0].mxu0
    %246 = vdwg.mxu0
    %247 = vmatprep.subr.mxu0 0.0
    %248 = vmatpush1.msra.mxu0 %v84
    %249 = vmatprep.subr.mxu0 0.0
    %250 = vmatpush1.msra.mxu0 %v85
    %251 = vmatprep.subr.mxu0 0.0
    %252 = vmatpush1.msra.mxu0 %v86
    %253 = vmatprep.subr.mxu0 0.0
    %254 = vmatpush1.msra.mxu0 %v87
    %255 = vmatprep.subr.mxu0 0.0
    %256 = vmatpush1.msra.mxu0 %v88
    %257 = vmatprep.subr.mxu0 0.0
    %258 = vmatpush1.msra.mxu0 %v89
    %259 = vmatprep.subr.mxu0 0.0
    %260 = vmatpush1.msra.mxu0 %v90
    %261 = vmatprep.subr.mxu0 0.0
    %262 = vmatpush1.msra.mxu0 %v91
    %263 = vmatprep.subr.mxu0 0.0
    %264 = vmatpush1.msra.mxu0 %v92
    %265 = vmatprep.subr.mxu0 0.0
    %266 = vmatpush1.msra.mxu0 %v93
    %267 = vmatprep.subr.mxu0 0.0
    %268 = vmatpush1.msra.mxu0 %v94
    %269 = vmatprep.subr.mxu0 0.0
    %270 = vmatpush1.msra.mxu0 %v95
    %271 = vmatprep.subr.mxu0 0.0
    %272 = vmatpush1.msra.mxu0 %v96
    %273 = vmatprep.subr.mxu0 0.0
    %274 = vmatpush1.msra.mxu0 %v97
    %275 = vmatprep.subr.mxu0 0.0
    %276 = vmatpush1.msra.mxu0 %v98
    %277 = vmatprep.subr.mxu0 0.0
    %278 = vmatpush1.msra.mxu0 %v99
    %279 = vmatprep.subr.mxu0 0.0
    %280 = vmatpush1.msra.mxu0 0.0
    %281 = vmatprep.subr.mxu0 0.0
    %282 = vmatpush1.msra.mxu0 0.0
    %283 = vmatprep.subr.mxu0 0.0
    %284 = vmatpush1.msra.mxu0 0.0
    %285 = vmatprep.subr.mxu0 0.0
    %286 = vmatpush1.msra.mxu0 0.0
    %287 = vmatprep.subr.mxu0 0.0
    %288 = vmatpush1.msra.mxu0 0.0
    %289 = vmatprep.subr.mxu0 0.0
    %290 = vmatpush1.msra.mxu0 0.0
    %291 = vmatprep.subr.mxu0 0.0
    %292 = vmatpush1.msra.mxu0 0.0
    %293 = vmatprep.subr.mxu0 0.0
    %294 = vmatpush1.msra.mxu0 0.0
    %295 = vmatprep.subr.mxu0 0.0
    %296 = vmatpush1.msra.mxu0 0.0
    %297 = vmatprep.subr.mxu0 0.0
    %298 = vmatpush1.msra.mxu0 0.0
    %299 = vmatprep.subr.mxu0 0.0
    %300 = vmatpush1.msra.mxu0 0.0
    %301 = vmatprep.subr.mxu0 0.0
    %302 = vmatpush1.msra.mxu0 0.0
    %303 = vmatprep.subr.mxu0 0.0
    %304 = vmatpush1.msra.mxu0 0.0
    %305 = vmatprep.subr.mxu0 0.0
    %306 = vmatpush1.msra.mxu0 0.0
    %307 = vmatprep.subr.mxu0 0.0
    %308 = vmatpush1.msra.mxu0 0.0
    %309 = vmatprep.subr.mxu0 0.0
    %310 = vmatpush1.msra.mxu0 0.0
    %311 = vmatprep.mubr.f32.mxu0 0.0
    %312 = vmatmul.mubr.f32.gmra.mrb[0].mxu0 %v19
    %v313 = vpop.f32.mrb[0].mxu0
    %v314 = vadd.f32 %v244, %v313
    %v315 = vpop.f32.mrb[0].mxu0
    %316 = vdwg.mxu0
    %317 = vst [vmem:[#allocation2] sm:$0xff] %v314
    // Predicated region
    $region14: #{classifier_forward.1} parent=1 // pred_check
      _
    $region15: #{classifier_forward.1} parent=1 // pred_check_branch
      %319 = sbr.rel (0) target = $region17
    $region16: #{classifier_forward.1} parent=1 // pred_region
      %s321 = ssub.s32 128, 128
      %322 = vsyncadd [#allocation3], %s321
      %s324 = sshll.u32 [#allocation2], 4
      %s325 = int_to_ptr.vmem [resolvable:$true] %s324
      %327 = dma.vmem_to_hbm [thread:$0]  %s325, 128, %s3, [#allocation3]
    $region17: #{classifier_forward.1} parent=1 // pred_fallthru
      _
    // Predicated region
    $region18: #{classifier_forward.1} parent=1 // pred_check
      _
    $region19: #{classifier_forward.1} parent=1 // pred_check_branch
      %329 = sbr.rel (0) target = $region21
    $region20: #{classifier_forward.1} parent=1 // pred_region
      %330 = dma.done [#allocation3], 128
    $region21: #{classifier_forward.1} parent=1 // pred_fallthru
      _
    %331 = vsyncpa [#allocation3], 1

</llo_original>
